<compile_context>
chip_gen: v5e
topology: v5e:2x2
jax: 0.10.0
libtpu: 0.0.40
codegen_flags: <defaults>
</compile_context>

<pallas_src>
import functools

import jax
import jax.numpy as jnp
from jax.experimental import pallas as pl
from jax.experimental.pallas import tpu as pltpu


def _round_up(x, m):
    return ((x + m - 1) // m) * m


def _physical_vmem_bytes():
    try:
        return int(pltpu.get_tpu_info().vmem_capacity_bytes)
    except Exception:
        return 64 << 20          # v7x-sized fallback: safe on every chip


def _ode_func_kernel(sign_ref, z_ref, w1_ref, b1_ref, w2_ref, b2_ref, o_ref,
                     *, compute_dtype):
    # Cast the state tile to the matmul dtype inside the kernel (free VPU
    # cast; avoids a separate wrapper-side HBM cast pass).
    z = z_ref[...].astype(compute_dtype)
    # Hidden layer: h = tanh(z @ W1 + b1)  (MXU matmul, f32 accum, EUP tanh).
    h = jnp.tanh(
        jnp.dot(z, w1_ref[...], preferred_element_type=jnp.float32)
        + b1_ref[...]
    )
    # Output layer: g = h @ W2 + b2.
    g = (
        jnp.dot(h.astype(compute_dtype), w2_ref[...],
                preferred_element_type=jnp.float32)
        + b2_ref[...]
    )
    # backwards negation as a runtime sign (SMEM scalar) -> single compile,
    # one VPU multiply (free under MXU/DMA slack).
    o_ref[...] = (g * sign_ref[0].astype(jnp.float32)).astype(o_ref.dtype)


def prepare_params(params, *, compute_dtype=jnp.bfloat16):
    """Pad/cast the func-net weights ONCE per ODE solve (hoisted glue).

    params: dict with w1 [D, H], b1 [H] or [1, H], w2 [H, D], b2 [D] or [1, D]
    """
    w1, b1, w2, b2 = params["w1"], params["b1"], params["w2"], params["b2"]
    D, H = w1.shape
    Dp = _round_up(D, 128)
    Hp = _round_up(H, 128)
    return {
        "w1": jnp.pad(w1, ((0, Dp - D), (0, Hp - H))).astype(compute_dtype),
        "b1": jnp.pad(b1.reshape(1, H), ((0, 0), (0, Hp - H))).astype(jnp.float32),
        "w2": jnp.pad(w2, ((0, Hp - H), (0, Dp - D))).astype(compute_dtype),
        "b2": jnp.pad(b2.reshape(1, D), ((0, 0), (0, Dp - D))).astype(jnp.float32),
        "D": D, "H": H, "Dp": Dp, "Hp": Hp,
        "compute_dtype": compute_dtype,
    }


def plan_tiles(N, prepared, *, tm=512, state_dtype=jnp.float32,
               out_dtype=None):
    """Pick the row tile / grid ONCE per solve; returns a static plan dict."""
    Dp, Hp = prepared["Dp"], prepared["Hp"]
    out_dtype = state_dtype if out_dtype is None else out_dtype
    cbytes = jnp.dtype(prepared["compute_dtype"]).itemsize
    sbytes = jnp.dtype(state_dtype).itemsize
    obytes = jnp.dtype(out_dtype).itemsize

    # Weight residency (single-buffered: grid-invariant Buffered(1) blocks).
    weight_bytes = 2 * Dp * Hp * cbytes + (Hp + Dp) * 4
    # Per-row VMEM: double-buffered z/out tiles + f32 hidden + f32 accum.
    per_row = 2 * Dp * sbytes + 2 * Dp * obytes + Hp * 4 + Dp * 4

    vmem_cap = int(_physical_vmem_bytes() * 0.85)
    budget = max(vmem_cap - weight_bytes - (4 << 20), 4 << 20)

    Np_one = _round_up(N, 16)            # bf16-friendly sublane granularity
    tm_eff = min(tm, _round_up(Np_one, 128))
    # Keep >= 2 "parallel" grid steps when there is enough work, so both
    # TensorCores are used on v7x.
    if Np_one > 256:
        tm_eff = min(tm_eff, _round_up(-(-Np_one // 2), 128))
    # Shrink (128-granular) until the tiles fit the VMEM budget.
    while tm_eff > 128 and tm_eff * per_row > budget:
        tm_eff = _round_up(tm_eff // 2, 128)
    if Np_one <= tm_eff:
        tm_eff = Np_one                  # single grid step, minimal padding
    Np = _round_up(N, tm_eff)

    vmem_limit = min(
        max(int((weight_bytes + tm_eff * per_row) * 1.25) + (2 << 20),
            16 << 20),
        vmem_cap,
    )
    return {
        "N": N, "Np": Np, "tm": tm_eff, "Dp": Dp, "Hp": Hp,
        "state_dtype": state_dtype, "out_dtype": out_dtype,
        "vmem_limit": vmem_limit,
    }


def pad_state(z, prepared, plan):
    """Pad [N, D] -> [Np, Dp] ONCE before the ODE solve.

    Zero padding keeps the math exact; padded rows/lanes are scratch and must
    not be read downstream (use unpad_state after the solve).
    """
    N, D = z.shape
    return jnp.pad(z, ((0, plan["Np"] - N), (0, plan["Dp"] - D))
                   ).astype(plan["state_dtype"])


def unpad_state(z_p, prepared, plan):
    """Slice the padded [Np, Dp] layout back to [N, D] ONCE after the solve."""
    return z_p[:plan["N"], :prepared["D"]]


def graph_ode_func_t_padded(z_p, prepared, plan, backwards=False):
    """Per-ODE-eval entry point: one fused pallas_call, zero wrapper glue.

    z_p: padded state [Np, Dp] in plan['state_dtype'].
    Returns the padded gradient [Np, Dp] in plan['out_dtype'].
    """
    Np, Dp, Hp, tm = plan["Np"], plan["Dp"], plan["Hp"], plan["tm"]
    sign = jnp.where(jnp.asarray(backwards), -1, 1).astype(jnp.int32).reshape(1)

    kernel = functools.partial(_ode_func_kernel,
                               compute_dtype=prepared["compute_dtype"])
    return pl.pallas_call(
        kernel,
        out_shape=jax.ShapeDtypeStruct((Np, Dp), plan["out_dtype"]),
        grid_spec=pltpu.PrefetchScalarGridSpec(
            num_scalar_prefetch=1,                          # sign -> SMEM
            grid=(Np // tm,),
            in_specs=[
                pl.BlockSpec((tm, Dp), lambda i, s: (i, 0)),     # z row tile
                pl.BlockSpec((Dp, Hp), lambda i, s: (0, 0),
                             pipeline_mode=pl.Buffered(1)),      # W1 resident
                pl.BlockSpec((1, Hp), lambda i, s: (0, 0),
                             pipeline_mode=pl.Buffered(1)),      # b1 resident
                pl.BlockSpec((Hp, Dp), lambda i, s: (0, 0),
                             pipeline_mode=pl.Buffered(1)),      # W2 resident
                pl.BlockSpec((1, Dp), lambda i, s: (0, 0),
                             pipeline_mode=pl.Buffered(1)),      # b2 resident
            ],
            out_specs=pl.BlockSpec((tm, Dp), lambda i, s: (i, 0)),
        ),
        compiler_params=pltpu.CompilerParams(
            dimension_semantics=("parallel",),              # 2-TC rows (v7x)
            vmem_limit_bytes=plan["vmem_limit"],
        ),
    )(sign, z_p, prepared["w1"], prepared["b1"], prepared["w2"],
      prepared["b2"])


def graph_ode_func_t(z, params, backwards=False, *, tm=512,
                     compute_dtype=jnp.bfloat16):
    """One-shot convenience wrapper matching GraphODEFuncT.forward(z).

    Inside an ODE solve prefer prepare_params + pad_state +
    graph_ode_func_t_padded so the padding/casting glue runs once per solve,
    not once per gradient evaluation.
    """
    prepared = prepare_params(params, compute_dtype=compute_dtype)
    plan = plan_tiles(z.shape[0], prepared, tm=tm, state_dtype=z.dtype)
    z_p = pad_state(z, prepared, plan)
    g_p = graph_ode_func_t_padded(z_p, prepared, plan, backwards=backwards)
    return unpad_state(g_p, prepared, plan)


def init_params(key, latent_dim, hidden_dim):
    """Deterministic synthetic parameter init (mimics nn.Linear shapes)."""
    k1, k2, k3, k4 = jax.random.split(key, 4)
    s1 = 1.0 / jnp.sqrt(latent_dim)
    s2 = 1.0 / jnp.sqrt(hidden_dim)
    return {
        "w1": jax.random.uniform(k1, (latent_dim, hidden_dim), jnp.float32,
                                 -s1, s1),
        "b1": jax.random.uniform(k2, (hidden_dim,), jnp.float32, -s1, s1),
        "w2": jax.random.uniform(k3, (hidden_dim, latent_dim), jnp.float32,
                                 -s2, s2),
        "b2": jax.random.uniform(k4, (latent_dim,), jnp.float32, -s2, s2),
    }


def _reference(z, params, backwards=False):
    h = jnp.tanh(z @ params["w1"] + params["b1"].reshape(1, -1))
    g = h @ params["w2"] + params["b2"].reshape(1, -1)
    return -g if backwards else g


if __name__ == "__main__":
    batch, num_nodes, latent_dim, hidden_dim = 2, 16, 32, 64

    key = jax.random.PRNGKey(0)
    kz, kp = jax.random.split(key)

    # z: value at the current time point -> [batch, num_nodes, latent_dim];
    # flattened to [N, D] (pure layout glue, done once).
    z3 = jax.random.normal(kz, (batch, num_nodes, latent_dim), jnp.float32)
    z = z3.reshape(batch * num_nodes, latent_dim)
    params = init_params(kp, latent_dim, hidden_dim)

    # --- once per ODE solve: hoisted padding / casting / tiling plan -------
    prepared = prepare_params(params, compute_dtype=jnp.bfloat16)
    plan = plan_tiles(z.shape[0], prepared, state_dtype=jnp.float32)
    z_p = pad_state(z, prepared, plan)

    # --- per-evaluation path (what an ODE integrator calls repeatedly):
    #     a single fused pallas_call; one compiled variant serves both time
    #     directions via the prefetched sign scalar.
    ode_eval = jax.jit(
        lambda zp, bwd: graph_ode_func_t_padded(zp, prepared, plan,
                                                backwards=bwd))

    grad_p = jax.block_until_ready(ode_eval(z_p, False))
    grad_bwd_p = jax.block_until_ready(ode_eval(z_p, True))

    grad = unpad_state(grad_p, prepared, plan)
    grad_bwd = unpad_state(grad_bwd_p, prepared, plan)

    # Convenience one-shot wrapper (original forward signature) also works.
    grad_oneshot = jax.block_until_ready(
        graph_ode_func_t(z, params, backwards=False))

    ref = _reference(z, params, backwards=False)
    ref_bwd = _reference(z, params, backwards=True)

    assert grad.shape == (batch * num_nodes, latent_dim)
    # bf16 matmul inputs (f32 accumulation) -> bf16-appropriate tolerances
    # against the f32 reference.
    assert jnp.allclose(grad, ref, atol=3e-2, rtol=3e-2)
    assert jnp.allclose(grad_bwd, ref_bwd, atol=3e-2, rtol=3e-2)
    assert jnp.allclose(grad_oneshot, ref, atol=3e-2, rtol=3e-2)
    # The two directions differ only by the sign scalar -> exact negation.
    assert jnp.allclose(grad_bwd, -grad, atol=1e-6, rtol=1e-6)

    print("KERNEL_OK")
</pallas_src>

<mosaic_0001>
module attributes {stable_mosaic.version = 11 : i64} {
  func.func @_ode_func_kernel(%arg0: i32, %arg1: memref<1xi32, #tpu.memory_space<smem>>, %arg2: memref<32x128xf32, #tpu.memory_space<vmem>>, %arg3: memref<128x128xbf16, #tpu.memory_space<vmem>>, %arg4: memref<1x128xf32, #tpu.memory_space<vmem>>, %arg5: memref<128x128xbf16, #tpu.memory_space<vmem>>, %arg6: memref<1x128xf32, #tpu.memory_space<vmem>>, %arg7: memref<32x128xf32, #tpu.memory_space<vmem>>) attributes {dimension_semantics = [#tpu.dimension_semantics<parallel>], iteration_bounds = array<i64: 1>, scalar_prefetch = 1 : i64, scratch_operands = 0 : i64, tpu.core_type = #tpu.core_type<tc>, window_params = [{transform_indices = @transform_0, window_bounds = array<i64: 32, 128>}, {pipeline_mode = #tpu.pipeline_mode<synchronous>, transform_indices = @transform_1, window_bounds = array<i64: 128, 128>}, {pipeline_mode = #tpu.pipeline_mode<synchronous>, transform_indices = @transform_2, window_bounds = array<i64: 1, 128>}, {pipeline_mode = #tpu.pipeline_mode<synchronous>, transform_indices = @transform_3, window_bounds = array<i64: 128, 128>}, {pipeline_mode = #tpu.pipeline_mode<synchronous>, transform_indices = @transform_4, window_bounds = array<i64: 1, 128>}, {transform_indices = @transform_5, window_bounds = array<i64: 32, 128>}]} {
    %c0 = arith.constant 0 : index
    %c0_0 = arith.constant 0 : index
    %0 = vector.load %arg2[%c0, %c0_0] : memref<32x128xf32, #tpu.memory_space<vmem>>, vector<32x128xf32>
    %1 = arith.truncf %0 : vector<32x128xf32> to vector<32x128xbf16>
    %c0_1 = arith.constant 0 : index
    %c0_2 = arith.constant 0 : index
    %2 = vector.load %arg3[%c0_1, %c0_2] : memref<128x128xbf16, #tpu.memory_space<vmem>>, vector<128x128xbf16>
    %cst = arith.constant dense<0.000000e+00> : vector<32x128xf32>
    %3 = tpu.matmul %1, %2, %cst {dimension_numbers = #tpu.dot_dimension_numbers<[1], [0], [0], [1], [0, 0, 1, 1], [], []>} : vector<32x128xbf16>, vector<128x128xbf16>, vector<32x128xf32> -> vector<32x128xf32>
    %c0_3 = arith.constant 0 : index
    %c0_4 = arith.constant 0 : index
    %4 = vector.load %arg4[%c0_3, %c0_4] : memref<1x128xf32, #tpu.memory_space<vmem>>, vector<1x128xf32>
    %5 = vector.broadcast %4 : vector<1x128xf32> to vector<32x128xf32>
    %6 = arith.addf %3, %5 : vector<32x128xf32>
    %7 = math.tanh %6 : vector<32x128xf32>
    %8 = arith.truncf %7 : vector<32x128xf32> to vector<32x128xbf16>
    %c0_5 = arith.constant 0 : index
    %c0_6 = arith.constant 0 : index
    %9 = vector.load %arg5[%c0_5, %c0_6] : memref<128x128xbf16, #tpu.memory_space<vmem>>, vector<128x128xbf16>
    %cst_7 = arith.constant dense<0.000000e+00> : vector<32x128xf32>
    %10 = tpu.matmul %8, %9, %cst_7 {dimension_numbers = #tpu.dot_dimension_numbers<[1], [0], [0], [1], [0, 0, 1, 1], [], []>} : vector<32x128xbf16>, vector<128x128xbf16>, vector<32x128xf32> -> vector<32x128xf32>
    %c0_8 = arith.constant 0 : index
    %c0_9 = arith.constant 0 : index
    %11 = vector.load %arg6[%c0_8, %c0_9] : memref<1x128xf32, #tpu.memory_space<vmem>>, vector<1x128xf32>
    %12 = vector.broadcast %11 : vector<1x128xf32> to vector<32x128xf32>
    %13 = arith.addf %10, %12 : vector<32x128xf32>
    %c0_10 = arith.constant 0 : index
    %14 = memref.load %arg1[%c0_10] : memref<1xi32, #tpu.memory_space<smem>>
    %15 = arith.sitofp %14 : i32 to f32
    %16 = vector.broadcast %15 : f32 to vector<32x128xf32>
    %17 = arith.mulf %13, %16 : vector<32x128xf32>
    %c0_11 = arith.constant 0 : index
    %c0_12 = arith.constant 0 : index
    %18 = vector.load %arg7[%c0_11, %c0_12] : memref<32x128xf32, #tpu.memory_space<vmem>>, vector<32x128xf32>
    tpu.vector_store %arg7[%c0_11, %c0_12], %17 {strides = array<i32>} : memref<32x128xf32, #tpu.memory_space<vmem>>, vector<32x128xf32>,
    return
  }
  func.func @transform_0(%arg0: i32, %arg1: memref<1xi32, #tpu.memory_space<smem>>) -> (i32, i32) {
    %c0_i32 = arith.constant 0 : i32
    %c0_i32_0 = arith.constant 0 : i32
    return %arg0, %c0_i32 : i32, i32
  }
  func.func @transform_1(%arg0: i32, %arg1: memref<1xi32, #tpu.memory_space<smem>>) -> (i32, i32) {
    %c0_i32 = arith.constant 0 : i32
    %c0_i32_0 = arith.constant 0 : i32
    %c0_i32_1 = arith.constant 0 : i32
    return %c0_i32, %c0_i32_0 : i32, i32
  }
  func.func @transform_2(%arg0: i32, %arg1: memref<1xi32, #tpu.memory_space<smem>>) -> (i32, i32) {
    %c0_i32 = arith.constant 0 : i32
    %c0_i32_0 = arith.constant 0 : i32
    %c0_i32_1 = arith.constant 0 : i32
    return %c0_i32, %c0_i32_0 : i32, i32
  }
  func.func @transform_3(%arg0: i32, %arg1: memref<1xi32, #tpu.memory_space<smem>>) -> (i32, i32) {
    %c0_i32 = arith.constant 0 : i32
    %c0_i32_0 = arith.constant 0 : i32
    %c0_i32_1 = arith.constant 0 : i32
    return %c0_i32, %c0_i32_0 : i32, i32
  }
  func.func @transform_4(%arg0: i32, %arg1: memref<1xi32, #tpu.memory_space<smem>>) -> (i32, i32) {
    %c0_i32 = arith.constant 0 : i32
    %c0_i32_0 = arith.constant 0 : i32
    %c0_i32_1 = arith.constant 0 : i32
    return %c0_i32, %c0_i32_0 : i32, i32
  }
  func.func @transform_5(%arg0: i32, %arg1: memref<1xi32, #tpu.memory_space<smem>>) -> (i32, i32) {
    %c0_i32 = arith.constant 0 : i32
    %c0_i32_0 = arith.constant 0 : i32
    return %arg0, %c0_i32 : i32, i32
  }
}

</mosaic_0001>

<llo_original>
// kernel: _lambda_.1
$region0: #{_lambda_.1}
  #allocation0 [shape = 'u32[]', space=smem, size = 0x4, offset = 0x4, fixed_abs, tag = 'smem constant byte address 0x4 - core index']
  #allocation1 [shape = 'u32[72,128]{1,0:T(1,128)}', space=vmem, size = 0x9000, scoped, tag = 'internal scratch']
  #allocation2 [shape = 's32[1]{0}', space=sflag, size = 0x4, scoped, tag = 'scoped memory for _lambda_.1']
  #allocation3 [shape = 's32[1]{0:T(128)S(6)}', space=smem, size = 0x200, scoped, tag = 'prefetched SMEM operand 0']
  %s0 = inlined_call_operand.<no memory space> [shape: s32[1], index: 0, kind: input, shape index: {}]
  %s1 = inlined_call_operand.hbm [shape: f32[32,128], index: 1, kind: input, shape index: {}]
  %s2 = inlined_call_operand.hbm [shape: bf16[128,128], index: 2, kind: input, shape index: {}]
  %s3 = inlined_call_operand.vmem [shape: f32[1,128], index: 3, kind: input, shape index: {}]
  %s4 = inlined_call_operand.hbm [shape: bf16[128,128], index: 4, kind: input, shape index: {}]
  %s5 = inlined_call_operand.vmem [shape: f32[1,128], index: 5, kind: input, shape index: {}]
  %s6 = inlined_call_operand.hbm [shape: f32[32,128], index: 6, kind: output, shape index: {}]
  %s7 = sld [smem:[#allocation0]]
  $region42: #{_lambda_.1} parent=0
    _
  %s9 = ssub.s32 1, %s7
  %s10 = scalar_select 0, %s9, %s7
  %11 = sst [smem:[#allocation3]] %s0
  $region1: #{_lambda_.1} parent=0
    #allocation4 [shape = 'u8[16384]{0}', space=vmem, size = 0x4000, scoped, tag = 'input window, operand 1, single buffered']
    #allocation5 [shape = 's32[1]{0}', space=sflag, size = 0x4, scoped, tag = 'scoped memory for _lambda_.1']
    #allocation6 [shape = 's32[1]{0}', space=sflag, size = 0x4, scoped, tag = 'scoped memory for _lambda_.1']
    #allocation7 [shape = 'u8[32768]{0}', space=vmem, size = 0x8000, scoped, tag = 'input window, operand 2, single buffered']
    #allocation8 [shape = 's32[1]{0}', space=sflag, size = 0x4, scoped, tag = 'scoped memory for _lambda_.1']
    #allocation9 [shape = 'u8[32768]{0}', space=vmem, size = 0x8000, scoped, tag = 'input window, operand 4, single buffered']
    #allocation10 [shape = 'u8[16384]{0}', space=vmem, size = 0x4000, scoped, tag = 'output window, operand 0, single buffered']
    %12 = vsyncpa [#allocation5], 0
    %13 = vsyncpa [#allocation8], 0
    %14 = vsyncpa [#allocation6], 0
    // Predicated region
    $region2: #{_lambda_.1} parent=1 // pred_check
      _
    $region3: #{_lambda_.1} parent=1 // pred_check_branch
      %16 = sbr.rel (0) target = $region5
    $region4: #{_lambda_.1} parent=1 // pred_region
      %18 = vsyncadd [#allocation5], 0
      %s19 = sshll.u32 %s1, 4
      %s20 = int_to_ptr.hbm [resolvable:$true] %s19
      %s21 = sshll.u32 [#allocation4], 4
      %s22 = int_to_ptr.vmem [resolvable:$true] %s21
      %27 = dma.hbm_to_vmem [thread:$0]  %s20, 512, %s22, [#allocation5], 128, 128, 8
    $region5: #{_lambda_.1} parent=1 // pred_fallthru
      _
    // Predicated region
    $region6: #{_lambda_.1} parent=1 // pred_check
      _
    $region7: #{_lambda_.1} parent=1 // pred_check_branch
      %29 = sbr.rel (0) target = $region9
    $region8: #{_lambda_.1} parent=1 // pred_region
      %31 = vsyncadd [#allocation8], 0
      %s32 = sshll.u32 %s2, 4
      %s33 = int_to_ptr.hbm [resolvable:$true] %s32
      %s34 = sshll.u32 [#allocation7], 4
      %s35 = int_to_ptr.vmem [resolvable:$true] %s34
      %40 = dma.hbm_to_vmem [thread:$0]  %s33, 1024, %s35, [#allocation8], 64, 64, 4
    $region9: #{_lambda_.1} parent=1 // pred_fallthru
      _
    // Predicated region
    $region10: #{_lambda_.1} parent=1 // pred_check
      _
    $region11: #{_lambda_.1} parent=1 // pred_check_branch
      %42 = sbr.rel (0) target = $region13
    $region12: #{_lambda_.1} parent=1 // pred_region
      _
    $region13: #{_lambda_.1} parent=1 // pred_fallthru
      _
    // Predicated region
    $region14: #{_lambda_.1} parent=1 // pred_check
      _
    $region15: #{_lambda_.1} parent=1 // pred_check_branch
      %44 = sbr.rel (0) target = $region17
    $region16: #{_lambda_.1} parent=1 // pred_region
      %46 = vsyncadd [#allocation8], 0
      %s47 = sshll.u32 %s4, 4
      %s48 = int_to_ptr.hbm [resolvable:$true] %s47
      %s49 = sshll.u32 [#allocation9], 4
      %s50 = int_to_ptr.vmem [resolvable:$true] %s49
      %55 = dma.hbm_to_vmem [thread:$0]  %s48, 1024, %s50, [#allocation8], 64, 64, 4
    $region17: #{_lambda_.1} parent=1 // pred_fallthru
      _
    // Predicated region
    $region18: #{_lambda_.1} parent=1 // pred_check
      _
    $region19: #{_lambda_.1} parent=1 // pred_check_branch
      %57 = sbr.rel (0) target = $region21
    $region20: #{_lambda_.1} parent=1 // pred_region
      _
    $region21: #{_lambda_.1} parent=1 // pred_fallthru
      _
    // Predicated region
    $region22: #{_lambda_.1} parent=1 // pred_check
      _
    $region23: #{_lambda_.1} parent=1 // pred_check_branch
      %59 = sbr.rel (0) target = $region25
    $region24: #{_lambda_.1} parent=1 // pred_region
      %61 = dma.done [#allocation5], 512
    $region25: #{_lambda_.1} parent=1 // pred_fallthru
      _
    // Predicated region
    $region26: #{_lambda_.1} parent=1 // pred_check
      _
    $region27: #{_lambda_.1} parent=1 // pred_check_branch
      %63 = sbr.rel (0) target = $region29
    $region28: #{_lambda_.1} parent=1 // pred_region
      %65 = dma.done [#allocation8], 1024
    $region29: #{_lambda_.1} parent=1 // pred_fallthru
      _
    // Predicated region
    $region30: #{_lambda_.1} parent=1 // pred_check
      _
    $region31: #{_lambda_.1} parent=1 // pred_check_branch
      %67 = sbr.rel (0) target = $region33
    $region32: #{_lambda_.1} parent=1 // pred_region
      %69 = dma.done [#allocation8], 1024
    $region33: #{_lambda_.1} parent=1 // pred_fallthru
      _
    %v70 = vld [vmem:[#allocation4] sm:$0xff]
    %v71 = vld [vmem:[#allocation4 + $0x8] sm:$0xff]
    %v72 = vld [vmem:[#allocation4 + $0x10] sm:$0xff]
    %v73 = vld [vmem:[#allocation4 + $0x18] sm:$0xff]
    %v74 = vpack.c.bf16 %v71, %v70
    %v75 = vpack.c.bf16 %v73, %v72
    %v76 = vld [vmem:[#allocation7] sm:$0xf]
    %v77 = vld [vmem:[#allocation7 + $0x4] sm:$0xf]
    %v78 = vld [vmem:[#allocation7 + $0x8] sm:$0xf]
    %v79 = vld [vmem:[#allocation7 + $0xc] sm:$0xf]
    %v80 = vld [vmem:[#allocation7 + $0x10] sm:$0xf]
    %v81 = vld [vmem:[#allocation7 + $0x14] sm:$0xf]
    %v82 = vld [vmem:[#allocation7 + $0x18] sm:$0xf]
    %v83 = vld [vmem:[#allocation7 + $0x1c] sm:$0xf]
    %v84 = vld [vmem:[#allocation7 + $0x20] sm:$0xf]
    %v85 = vld [vmem:[#allocation7 + $0x24] sm:$0xf]
    %v86 = vld [vmem:[#allocation7 + $0x28] sm:$0xf]
    %v87 = vld [vmem:[#allocation7 + $0x2c] sm:$0xf]
    %v88 = vld [vmem:[#allocation7 + $0x30] sm:$0xf]
    %v89 = vld [vmem:[#allocation7 + $0x34] sm:$0xf]
    %v90 = vld [vmem:[#allocation7 + $0x38] sm:$0xf]
    %v91 = vld [vmem:[#allocation7 + $0x3c] sm:$0xf]
    %v92 = vld [vmem:[%s3] sm:$0x1]
    %v94 = vperm.slane %v92, 0
    %v112 = vunpack.c.l.b16 %v76
    %v113 = vunpack.c.l.b16 %v77
    %v114 = vunpack.c.l.b16 %v78
    %v115 = vunpack.c.l.b16 %v79
    %v116 = vunpack.c.l.b16 %v80
    %v117 = vunpack.c.l.b16 %v81
    %v118 = vunpack.c.l.b16 %v82
    %v119 = vunpack.c.l.b16 %v83
    %v120 = vunpack.c.l.b16 %v84
    %v121 = vunpack.c.l.b16 %v85
    %v122 = vunpack.c.l.b16 %v86
    %v123 = vunpack.c.l.b16 %v87
    %v124 = vunpack.c.l.b16 %v88
    %v125 = vunpack.c.l.b16 %v89
    %v126 = vunpack.c.l.b16 %v90
    %v127 = vunpack.c.l.b16 %v91
    %v128 = vpack.c.b16 %v113, %v112
    %v129 = vpack.c.b16 %v115, %v114
    %v130 = vpack.c.b16 %v117, %v116
    %v131 = vpack.c.b16 %v119, %v118
    %v132 = vpack.c.b16 %v121, %v120
    %v133 = vpack.c.b16 %v123, %v122
    %v134 = vpack.c.b16 %v125, %v124
    %v135 = vpack.c.b16 %v127, %v126
    %144 = vmatpush.bf16.msra.mxu0 %v135
    %145 = vmatpush.bf16.msra.mxu0 %v134
    %146 = vmatpush.bf16.msra.mxu0 %v133
    %147 = vmatpush.bf16.msra.mxu0 %v132
    %148 = vmatpush.bf16.msra.mxu0 %v131
    %149 = vmatpush.bf16.msra.mxu0 %v130
    %150 = vmatpush.bf16.msra.mxu0 %v129
    %151 = vmatpush.bf16.msra.mxu0 %v128
    %152 = vmatmul.bf16.gmra.mxu0 %v74
    %v153 = vpop.f32.mrf.mxu0
    %v154 = vadd.f32 %v94, %v153
    %v155 = vpop.f32.mrf.mxu0
    %v156 = vadd.f32 %v94, %v155
    %157 = vmatmul.bf16.gmra.mxu0 %v75
    %v158 = vpop.f32.mrf.mxu0
    %v159 = vadd.f32 %v94, %v158
    %v160 = vpop.f32.mrf.mxu0
    %v161 = vadd.f32 %v94, %v160
    %162 = vdwg.mxu0
    %v163 = vtanh.pop %v154
    %v164 = vtanh.pop %v156
    %v165 = vtanh.pop %v159
    %v166 = vtanh.pop %v161
    %v167 = vpack.c.bf16 %v164, %v163
    %v168 = vpack.c.bf16 %v166, %v165
    %v169 = vld [vmem:[#allocation9] sm:$0xf]
    %v170 = vld [vmem:[#allocation9 + $0x4] sm:$0xf]
    %v171 = vld [vmem:[#allocation9 + $0x8] sm:$0xf]
    %v172 = vld [vmem:[#allocation9 + $0xc] sm:$0xf]
    %v173 = vld [vmem:[#allocation9 + $0x10] sm:$0xf]
    %v174 = vld [vmem:[#allocation9 + $0x14] sm:$0xf]
    %v175 = vld [vmem:[#allocation9 + $0x18] sm:$0xf]
    %v176 = vld [vmem:[#allocation9 + $0x1c] sm:$0xf]
    %v177 = vld [vmem:[#allocation9 + $0x20] sm:$0xf]
    %v178 = vld [vmem:[#allocation9 + $0x24] sm:$0xf]
    %v179 = vld [vmem:[#allocation9 + $0x28] sm:$0xf]
    %v180 = vld [vmem:[#allocation9 + $0x2c] sm:$0xf]
    %v181 = vld [vmem:[#allocation9 + $0x30] sm:$0xf]
    %v182 = vld [vmem:[#allocation9 + $0x34] sm:$0xf]
    %v183 = vld [vmem:[#allocation9 + $0x38] sm:$0xf]
    %v184 = vld [vmem:[#allocation9 + $0x3c] sm:$0xf]
    %v185 = vld [vmem:[%s5] sm:$0x1]
    %v187 = vperm.slane %v185, 0
    %v205 = vunpack.c.l.b16 %v169
    %v206 = vunpack.c.l.b16 %v170
    %v207 = vunpack.c.l.b16 %v171
    %v208 = vunpack.c.l.b16 %v172
    %v209 = vunpack.c.l.b16 %v173
    %v210 = vunpack.c.l.b16 %v174
    %v211 = vunpack.c.l.b16 %v175
    %v212 = vunpack.c.l.b16 %v176
    %v213 = vunpack.c.l.b16 %v177
    %v214 = vunpack.c.l.b16 %v178
    %v215 = vunpack.c.l.b16 %v179
    %v216 = vunpack.c.l.b16 %v180
    %v217 = vunpack.c.l.b16 %v181
    %v218 = vunpack.c.l.b16 %v182
    %v219 = vunpack.c.l.b16 %v183
    %v220 = vunpack.c.l.b16 %v184
    %v221 = vpack.c.b16 %v206, %v205
    %v222 = vpack.c.b16 %v208, %v207
    %v223 = vpack.c.b16 %v210, %v209
    %v224 = vpack.c.b16 %v212, %v211
    %v225 = vpack.c.b16 %v214, %v213
    %v226 = vpack.c.b16 %v216, %v215
    %v227 = vpack.c.b16 %v218, %v217
    %v228 = vpack.c.b16 %v220, %v219
    %237 = vmatpush.bf16.msra.mxu0 %v228
    %238 = vmatpush.bf16.msra.mxu0 %v227
    %239 = vmatpush.bf16.msra.mxu0 %v226
    %240 = vmatpush.bf16.msra.mxu0 %v225
    %241 = vmatpush.bf16.msra.mxu0 %v224
    %242 = vmatpush.bf16.msra.mxu0 %v223
    %243 = vmatpush.bf16.msra.mxu0 %v222
    %244 = vmatpush.bf16.msra.mxu0 %v221
    %245 = vmatmul.bf16.gmra.mxu0 %v167
    %v246 = vpop.f32.mrf.mxu0
    %v247 = vadd.f32 %v187, %v246
    %v248 = vpop.f32.mrf.mxu0
    %v249 = vadd.f32 %v187, %v248
    %250 = vmatmul.bf16.gmra.mxu0 %v168
    %v251 = vpop.f32.mrf.mxu0
    %v252 = vadd.f32 %v187, %v251
    %v253 = vpop.f32.mrf.mxu0
    %v254 = vadd.f32 %v187, %v253
    %255 = vdwg.mxu0
    %s256 = sld [smem:[#allocation3]]
    %s257 = scvt.s32.f32 %s256
    %v258 = vstv %s257
    %v259 = vmul.f32 %v247, %v258
    %v260 = vmul.f32 %v249, %v258
    %v261 = vmul.f32 %v252, %v258
    %v262 = vmul.f32 %v254, %v258
    %263 = vst [vmem:[#allocation10] sm:$0xff] %v259
    %264 = vst [vmem:[#allocation10 + $0x8] sm:$0xff] %v260
    %265 = vst [vmem:[#allocation10 + $0x10] sm:$0xff] %v261
    %266 = vst [vmem:[#allocation10 + $0x18] sm:$0xff] %v262
    // Predicated region
    $region34: #{_lambda_.1} parent=1 // pred_check
      _
    $region35: #{_lambda_.1} parent=1 // pred_check_branch
      %268 = sbr.rel (0) target = $region37
    $region36: #{_lambda_.1} parent=1 // pred_region
      %270 = vsyncadd [#allocation6], 0
      %s271 = sshll.u32 [#allocation10], 4
      %s272 = int_to_ptr.vmem [resolvable:$true] %s271
      %s273 = sshll.u32 %s6, 4
      %s274 = int_to_ptr.hbm [resolvable:$true] %s273
      %279 = dma.vmem_to_hbm [thread:$0]  %s272, 512, %s274, [#allocation6], 128, 128, 8
    $region37: #{_lambda_.1} parent=1 // pred_fallthru
      _
    // Predicated region
    $region38: #{_lambda_.1} parent=1 // pred_check
      _
    $region39: #{_lambda_.1} parent=1 // pred_check_branch
      %281 = sbr.rel (0) target = $region41
    $region40: #{_lambda_.1} parent=1 // pred_region
      %283 = dma.done [#allocation6], 512
    $region41: #{_lambda_.1} parent=1 // pred_fallthru
      _
    %284 = vsyncpa [#allocation5], 1
    %285 = vsyncpa [#allocation8], 1
    %286 = vsyncpa [#allocation6], 1

</llo_original>
